<compile_context>
chip_gen: v7x
topology: tpu7x:2x2x1
jax: 0.10.0
libtpu: 0.0.40
codegen_flags: <defaults>
</compile_context>

<pallas_src>
import functools

import jax
import jax.numpy as jnp
from jax.experimental import pallas as pl
from jax.experimental.pallas import tpu as pltpu


# --------------------------------------------------------------------------
# Kernel 1: fused QKV projection (scale pre-folded into Wq / bq on the host).
# --------------------------------------------------------------------------
def _qkv_proj_kernel(x_ref, wq_ref, bq_ref, wk_ref, bk_ref, wv_ref, bv_ref,
                     q_ref, k_ref, v_ref):
    x = x_ref[0]                                                    # (T, W) bf16
    q = jnp.dot(x, wq_ref[...], preferred_element_type=jnp.float32) + bq_ref[...]
    k = jnp.dot(x, wk_ref[...], preferred_element_type=jnp.float32) + bk_ref[...]
    v = jnp.dot(x, wv_ref[...], preferred_element_type=jnp.float32) + bv_ref[...]
    q_ref[0] = q.astype(q_ref.dtype)
    k_ref[0] = k.astype(k_ref.dtype)
    v_ref[0] = v.astype(v_ref.dtype)


# --------------------------------------------------------------------------
# Kernel 2: flash attention (online softmax over KV tiles) + W_o projection.
# --------------------------------------------------------------------------
def _flash_attn_out_kernel(q_ref, k_ref, v_ref, wo_ref, bo_ref, o_ref,
                           m_scr, l_scr, acc_scr, *, n_heads, head_size):
    """Grid step = (batch b, q-tile qi, kv-tile ki). ki is the reduction axis.

    q_ref   : (1, TQ, W) bf16  pre-projected Q (scale already folded in)
    k_ref   : (1, TK, W) bf16  pre-projected K
    v_ref   : (1, TK, W) bf16  pre-projected V
    wo_ref  : (W, W) bf16, bo_ref : (1, W) f32
    o_ref   : (1, TQ, W)
    m_scr   : (TQ, H) f32   running max   (head h = column h)
    l_scr   : (TQ, H) f32   running denom (head h = column h)
    acc_scr : (TQ, W) f32   running P@V   (head h = columns h*hs:(h+1)*hs)
    """
    ki = pl.program_id(2)
    nk = pl.num_programs(2)
    H, hs = n_heads, head_size

    @pl.when(ki == 0)
    def _init():
        m_scr[...] = jnp.full(m_scr.shape, -jnp.inf, jnp.float32)
        l_scr[...] = jnp.zeros(l_scr.shape, jnp.float32)
        acc_scr[...] = jnp.zeros(acc_scr.shape, jnp.float32)

    q = q_ref[0]                                                    # (TQ, W) bf16
    k = k_ref[0]                                                    # (TK, W) bf16
    v = v_ref[0]                                                    # (TK, W) bf16

    # Contract lane dims of q and k directly: q @ k^T without a physical .T
    dnums = (((1,), (1,)), ((), ()))

    # Per-head online-softmax update.  H is small here -> static unroll.
    # TODO(synk): for large H switch to lax.fori_loop over head chunks (with
    #             pl.ds + pl.multiple_of column slices) to bound live ranges.
    for h in range(H):
        sl = slice(h * hs, (h + 1) * hs)
        s = jax.lax.dot_general(q[:, sl], k[:, sl], dnums,
                                preferred_element_type=jnp.float32)  # (TQ, TK)
        m_prev = m_scr[:, h:h + 1]                                   # (TQ, 1)
        m_new = jnp.maximum(m_prev, jnp.max(s, axis=-1, keepdims=True))
        alpha = jnp.exp(m_prev - m_new)
        # TODO(synk): on v6e/v7x (bf16 EUP) exp((s - m_new).astype(bf16)) would
        #             roughly double transcendental throughput; kept f32 here
        #             for accuracy and v5e compatibility.
        p = jnp.exp(s - m_new)                                       # (TQ, TK) f32
        l_scr[:, h:h + 1] = alpha * l_scr[:, h:h + 1] + jnp.sum(
            p, axis=-1, keepdims=True)
        acc_scr[:, sl] = alpha * acc_scr[:, sl] + jnp.dot(
            p.astype(jnp.bfloat16), v[:, sl],
            preferred_element_type=jnp.float32)                     # (TQ, hs)
        m_scr[:, h:h + 1] = m_new

    # Last KV tile: normalize per-head column slices (exact reciprocal — off
    # the per-KV-tile critical path), then one lane-dense matmul with W_o.
    @pl.when(ki == nk - 1)
    def _finalize():
        for h in range(H):
            sl = slice(h * hs, (h + 1) * hs)
            acc_scr[:, sl] = acc_scr[:, sl] * (1.0 / l_scr[:, h:h + 1])
        out = jnp.dot(acc_scr[...].astype(jnp.bfloat16), wo_ref[...],
                      preferred_element_type=jnp.float32) + bo_ref[...]
        o_ref[0] = out.astype(o_ref.dtype)


# --------------------------------------------------------------------------
# Wrapper
# --------------------------------------------------------------------------
def _pick_tile(S, prefer=(512, 256, 128)):
    for t in prefer:
        if S % t == 0:
            return t
    return S  # small / odd S -> single full-extent tile


def _vmem_limit(working_set_bytes):
    # Working set + 50% headroom, floor 16 MiB, cap at v7x physical (64 MiB).
    return int(max(16 << 20, min(working_set_bytes * 3 // 2 + (2 << 20), 64 << 20)))


def multi_head_attention(x, params, *, n_heads, tq=None, tk=None, t_proj=None):
    """x: (B, S, W) float32. params: per-head weights (see init_params)."""
    B, S, W = x.shape
    hs = W // n_heads
    assert n_heads * hs == W, "width must be divisible by n_heads"

    scale = 1.0 / jnp.sqrt(jnp.float32(hs))

    # Fuse per-head (H, W, hs) weights into (W, W) (head h = columns h*hs:(h+1)*hs),
    # fold the attention scale into Wq/bq, cast weights to bf16 (biases stay f32).
    def fuse(w):
        return jnp.transpose(w, (1, 0, 2)).reshape(W, W)

    wq = (fuse(params["wq"]) * scale).astype(jnp.bfloat16)
    wk = fuse(params["wk"]).astype(jnp.bfloat16)
    wv = fuse(params["wv"]).astype(jnp.bfloat16)
    bq = (params["bq"].reshape(1, W) * scale).astype(jnp.float32)
    bk = params["bk"].reshape(1, W).astype(jnp.float32)
    bv = params["bv"].reshape(1, W).astype(jnp.float32)
    wo = params["wo"].astype(jnp.bfloat16)       # rows h*hs:(h+1)*hs = head h
    bo = params["bo"].reshape(1, W).astype(jnp.float32)

    x_bf = x.astype(jnp.bfloat16)                # halve streamed HBM bytes

    t_proj = t_proj or _pick_tile(S)
    # TQ controls acc/out residency (smaller for v7x's 64 MiB VMEM); TK stays
    # large to amortize per-step overhead.
    tq = tq or _pick_tile(S, prefer=(256, 512, 128))
    tk = tk or _pick_tile(S, prefer=(512, 256, 128))

    # ---------------- Kernel 1: QKV projection (each x row projected once) ----
    def const1(shape):
        return pl.BlockSpec(shape, lambda b, i: (0,) * len(shape),
                            pipeline_mode=pl.Buffered(1))   # single-buffer consts

    proj_vmem = (2 * t_proj * W * 2              # x tile (double-buffered, bf16)
                 + 3 * W * W * 2                 # wq/wk/wv (single-buffered)
                 + 3 * 8 * W * 4                 # biases (sublane padded)
                 + 3 * 2 * t_proj * W * 2)       # q/k/v out tiles (double-buffered)

    q, k, v = pl.pallas_call(
        _qkv_proj_kernel,
        out_shape=(jax.ShapeDtypeStruct((B, S, W), jnp.bfloat16),) * 3,
        grid=(B, S // t_proj),
        in_specs=[
            pl.BlockSpec((1, t_proj, W), lambda b, i: (b, i, 0)),
            const1((W, W)), const1((1, W)),      # wq, bq
            const1((W, W)), const1((1, W)),      # wk, bk
            const1((W, W)), const1((1, W)),      # wv, bv
        ],
        out_specs=(pl.BlockSpec((1, t_proj, W), lambda b, i: (b, i, 0)),) * 3,
        compiler_params=pltpu.CompilerParams(
            dimension_semantics=("parallel", "parallel"),
            vmem_limit_bytes=_vmem_limit(proj_vmem)),
    )(x_bf, wq, bq, wk, bk, wv, bv)

    # ---------------- Kernel 2: flash attention + output projection -----------
    def const2(shape):
        return pl.BlockSpec(shape, lambda b, qi, ki: (0,) * len(shape),
                            pipeline_mode=pl.Buffered(1))

    attn_vmem = (2 * tq * W * 2                  # q tile
                 + 2 * 2 * tk * W * 2            # k, v tiles
                 + W * W * 2 + 8 * W * 4         # wo, bo (single-buffered)
                 + 2 * tq * W * x.dtype.itemsize # out tile
                 + tq * W * 4                    # acc scratch
                 + 2 * tq * 128 * 4)             # m / l stats (lane padded)

    kernel = functools.partial(_flash_attn_out_kernel,
                               n_heads=n_heads, head_size=hs)

    return pl.pallas_call(
        kernel,
        out_shape=jax.ShapeDtypeStruct((B, S, W), x.dtype),
        grid=(B, S // tq, S // tk),
        in_specs=[
            pl.BlockSpec((1, tq, W), lambda b, qi, ki: (b, qi, 0)),   # Q tile
            pl.BlockSpec((1, tk, W), lambda b, qi, ki: (b, ki, 0)),   # K tile
            pl.BlockSpec((1, tk, W), lambda b, qi, ki: (b, ki, 0)),   # V tile
            const2((W, W)), const2((1, W)),                           # wo, bo
        ],
        out_specs=pl.BlockSpec((1, tq, W), lambda b, qi, ki: (b, qi, 0)),
        scratch_shapes=[
            pltpu.VMEM((tq, n_heads), jnp.float32),   # running max (per-head col)
            pltpu.VMEM((tq, n_heads), jnp.float32),   # running denom
            pltpu.VMEM((tq, W), jnp.float32),         # lane-dense P@V accumulator
        ],
        compiler_params=pltpu.CompilerParams(
            dimension_semantics=("parallel", "parallel", "arbitrary"),
            vmem_limit_bytes=_vmem_limit(attn_vmem)),
    )(q, k, v, wo, bo)


# --------------------------------------------------------------------------
# Parameters & reference
# --------------------------------------------------------------------------
def init_params(key, width, n_heads):
    """Per-head layout like the torch module.  Weights stored pre-transposed
    (in_dim, out_dim) so y = x @ W + b (== torch Linear's x @ W^T + b)."""
    hs = width // n_heads
    keys = jax.random.split(key, 8)
    scale = 1.0 / jnp.sqrt(jnp.float32(width))
    return {
        "wq": jax.random.normal(keys[0], (n_heads, width, hs), jnp.float32) * scale,
        "bq": jax.random.normal(keys[1], (n_heads, 1, hs), jnp.float32) * scale,
        "wk": jax.random.normal(keys[2], (n_heads, width, hs), jnp.float32) * scale,
        "bk": jax.random.normal(keys[3], (n_heads, 1, hs), jnp.float32) * scale,
        "wv": jax.random.normal(keys[4], (n_heads, width, hs), jnp.float32) * scale,
        "bv": jax.random.normal(keys[5], (n_heads, 1, hs), jnp.float32) * scale,
        "wo": jax.random.normal(keys[6], (width, width), jnp.float32) * scale,
        "bo": jax.random.normal(keys[7], (1, width), jnp.float32) * scale,
    }


def reference_mha(x, params, n_heads):
    """Pure-JAX f32 reference matching the PyTorch forward semantics."""
    B, S, W = x.shape
    hs = W // n_heads
    outs = []
    for h in range(n_heads):
        q = x @ params["wq"][h] + params["bq"][h]
        k = x @ params["wk"][h] + params["bk"][h]
        v = x @ params["wv"][h] + params["bv"][h]
        att = (q @ jnp.swapaxes(k, -1, -2)) / jnp.sqrt(jnp.float32(hs))
        att = jax.nn.softmax(att, axis=-1)
        outs.append(att @ v)
    cat = jnp.concatenate(outs, axis=-1)
    return cat @ params["wo"] + params["bo"]


if __name__ == "__main__":
    B, S, width, n_heads = 2, 8, 32, 4

    key = jax.random.PRNGKey(0)
    kx, kp = jax.random.split(key)
    x = jax.random.normal(kx, (B, S, width), jnp.float32)
    params = init_params(kp, width, n_heads)

    out = multi_head_attention(x, params, n_heads=n_heads)
    out = jax.block_until_ready(out)

    ref = reference_mha(x, params, n_heads)
    assert out.shape == (B, S, width)
    # bf16 MXU inputs -> loosened tolerance vs the f32 reference (expected
    # precision loss, not a bug).
    assert jnp.allclose(out, ref, atol=3e-2, rtol=3e-2), "mismatch vs reference"

    print("KERNEL_OK")
</pallas_src>

<mosaic_0001>
module attributes {stable_mosaic.version = 11 : i64} {
  func.func @_qkv_proj_kernel(%arg0: i32, %arg1: i32, %arg2: memref<1x8x32xbf16, #tpu.memory_space<vmem>>, %arg3: memref<32x32xbf16, #tpu.memory_space<vmem>>, %arg4: memref<1x32xf32, #tpu.memory_space<vmem>>, %arg5: memref<32x32xbf16, #tpu.memory_space<vmem>>, %arg6: memref<1x32xf32, #tpu.memory_space<vmem>>, %arg7: memref<32x32xbf16, #tpu.memory_space<vmem>>, %arg8: memref<1x32xf32, #tpu.memory_space<vmem>>, %arg9: memref<1x8x32xbf16, #tpu.memory_space<vmem>>, %arg10: memref<1x8x32xbf16, #tpu.memory_space<vmem>>, %arg11: memref<1x8x32xbf16, #tpu.memory_space<vmem>>) attributes {dimension_semantics = [#tpu.dimension_semantics<parallel>, #tpu.dimension_semantics<parallel>], iteration_bounds = array<i64: 2, 1>, scalar_prefetch = 0 : i64, scratch_operands = 0 : i64, tpu.core_type = #tpu.core_type<tc>, window_params = [{transform_indices = @transform_0, window_bounds = array<i64: 1, 8, 32>}, {pipeline_mode = #tpu.pipeline_mode<synchronous>, transform_indices = @transform_1, window_bounds = array<i64: 32, 32>}, {pipeline_mode = #tpu.pipeline_mode<synchronous>, transform_indices = @transform_2, window_bounds = array<i64: 1, 32>}, {pipeline_mode = #tpu.pipeline_mode<synchronous>, transform_indices = @transform_3, window_bounds = array<i64: 32, 32>}, {pipeline_mode = #tpu.pipeline_mode<synchronous>, transform_indices = @transform_4, window_bounds = array<i64: 1, 32>}, {pipeline_mode = #tpu.pipeline_mode<synchronous>, transform_indices = @transform_5, window_bounds = array<i64: 32, 32>}, {pipeline_mode = #tpu.pipeline_mode<synchronous>, transform_indices = @transform_6, window_bounds = array<i64: 1, 32>}, {transform_indices = @transform_7, window_bounds = array<i64: 1, 8, 32>}, {transform_indices = @transform_8, window_bounds = array<i64: 1, 8, 32>}, {transform_indices = @transform_9, window_bounds = array<i64: 1, 8, 32>}]} {
    %c0 = arith.constant 0 : index
    %c0_0 = arith.constant 0 : index
    %c0_1 = arith.constant 0 : index
    %0 = vector.load %arg2[%c0, %c0_0, %c0_1] : memref<1x8x32xbf16, #tpu.memory_space<vmem>>, vector<1x8x32xbf16>
    %1 = vector.shape_cast %0 : vector<1x8x32xbf16> to vector<8x32xbf16>
    %c0_2 = arith.constant 0 : index
    %c0_3 = arith.constant 0 : index
    %2 = vector.load %arg3[%c0_2, %c0_3] : memref<32x32xbf16, #tpu.memory_space<vmem>>, vector<32x32xbf16>
    %cst = arith.constant dense<0.000000e+00> : vector<8x32xf32>
    %3 = tpu.matmul %1, %2, %cst {dimension_numbers = #tpu.dot_dimension_numbers<[1], [0], [0], [1], [0, 0, 1, 1], [], []>} : vector<8x32xbf16>, vector<32x32xbf16>, vector<8x32xf32> -> vector<8x32xf32>
    %c0_4 = arith.constant 0 : index
    %c0_5 = arith.constant 0 : index
    %4 = vector.load %arg4[%c0_4, %c0_5] : memref<1x32xf32, #tpu.memory_space<vmem>>, vector<1x32xf32>
    %5 = vector.broadcast %4 : vector<1x32xf32> to vector<8x32xf32>
    %6 = arith.addf %3, %5 : vector<8x32xf32>
    %c0_6 = arith.constant 0 : index
    %c0_7 = arith.constant 0 : index
    %7 = vector.load %arg5[%c0_6, %c0_7] : memref<32x32xbf16, #tpu.memory_space<vmem>>, vector<32x32xbf16>
    %cst_8 = arith.constant dense<0.000000e+00> : vector<8x32xf32>
    %8 = tpu.matmul %1, %7, %cst_8 {dimension_numbers = #tpu.dot_dimension_numbers<[1], [0], [0], [1], [0, 0, 1, 1], [], []>} : vector<8x32xbf16>, vector<32x32xbf16>, vector<8x32xf32> -> vector<8x32xf32>
    %c0_9 = arith.constant 0 : index
    %c0_10 = arith.constant 0 : index
    %9 = vector.load %arg6[%c0_9, %c0_10] : memref<1x32xf32, #tpu.memory_space<vmem>>, vector<1x32xf32>
    %10 = vector.broadcast %9 : vector<1x32xf32> to vector<8x32xf32>
    %11 = arith.addf %8, %10 : vector<8x32xf32>
    %c0_11 = arith.constant 0 : index
    %c0_12 = arith.constant 0 : index
    %12 = vector.load %arg7[%c0_11, %c0_12] : memref<32x32xbf16, #tpu.memory_space<vmem>>, vector<32x32xbf16>
    %cst_13 = arith.constant dense<0.000000e+00> : vector<8x32xf32>
    %13 = tpu.matmul %1, %12, %cst_13 {dimension_numbers = #tpu.dot_dimension_numbers<[1], [0], [0], [1], [0, 0, 1, 1], [], []>} : vector<8x32xbf16>, vector<32x32xbf16>, vector<8x32xf32> -> vector<8x32xf32>
    %c0_14 = arith.constant 0 : index
    %c0_15 = arith.constant 0 : index
    %14 = vector.load %arg8[%c0_14, %c0_15] : memref<1x32xf32, #tpu.memory_space<vmem>>, vector<1x32xf32>
    %15 = vector.broadcast %14 : vector<1x32xf32> to vector<8x32xf32>
    %16 = arith.addf %13, %15 : vector<8x32xf32>
    %17 = arith.truncf %6 : vector<8x32xf32> to vector<8x32xbf16>
    %c0_16 = arith.constant 0 : index
    %c0_17 = arith.constant 0 : index
    %c0_18 = arith.constant 0 : index
    %18 = vector.load %arg9[%c0_16, %c0_17, %c0_18] : memref<1x8x32xbf16, #tpu.memory_space<vmem>>, vector<1x8x32xbf16>
    %19 = vector.shape_cast %18 : vector<1x8x32xbf16> to vector<8x32xbf16>
    %20 = vector.shape_cast %17 : vector<8x32xbf16> to vector<1x8x32xbf16>
    tpu.vector_store %arg9[%c0_16, %c0_17, %c0_18], %20 {strides = array<i32>} : memref<1x8x32xbf16, #tpu.memory_space<vmem>>, vector<1x8x32xbf16>,
    %21 = arith.truncf %11 : vector<8x32xf32> to vector<8x32xbf16>
    %c0_19 = arith.constant 0 : index
    %c0_20 = arith.constant 0 : index
    %c0_21 = arith.constant 0 : index
    %22 = vector.load %arg10[%c0_19, %c0_20, %c0_21] : memref<1x8x32xbf16, #tpu.memory_space<vmem>>, vector<1x8x32xbf16>
    %23 = vector.shape_cast %22 : vector<1x8x32xbf16> to vector<8x32xbf16>
    %24 = vector.shape_cast %21 : vector<8x32xbf16> to vector<1x8x32xbf16>
    tpu.vector_store %arg10[%c0_19, %c0_20, %c0_21], %24 {strides = array<i32>} : memref<1x8x32xbf16, #tpu.memory_space<vmem>>, vector<1x8x32xbf16>,
    %25 = arith.truncf %16 : vector<8x32xf32> to vector<8x32xbf16>
    %c0_22 = arith.constant 0 : index
    %c0_23 = arith.constant 0 : index
    %c0_24 = arith.constant 0 : index
    %26 = vector.load %arg11[%c0_22, %c0_23, %c0_24] : memref<1x8x32xbf16, #tpu.memory_space<vmem>>, vector<1x8x32xbf16>
    %27 = vector.shape_cast %26 : vector<1x8x32xbf16> to vector<8x32xbf16>
    %28 = vector.shape_cast %25 : vector<8x32xbf16> to vector<1x8x32xbf16>
    tpu.vector_store %arg11[%c0_22, %c0_23, %c0_24], %28 {strides = array<i32>} : memref<1x8x32xbf16, #tpu.memory_space<vmem>>, vector<1x8x32xbf16>,
    return
  }
  func.func @transform_0(%arg0: i32, %arg1: i32) -> (i32, i32, i32) {
    %c0_i32 = arith.constant 0 : i32
    %c0_i32_0 = arith.constant 0 : i32
    return %arg0, %arg1, %c0_i32 : i32, i32, i32
  }
  func.func @transform_1(%arg0: i32, %arg1: i32) -> (i32, i32) {
    %c0_i32 = arith.constant 0 : i32
    %c0_i32_0 = arith.constant 0 : i32
    %c0_i32_1 = arith.constant 0 : i32
    return %c0_i32, %c0_i32_0 : i32, i32
  }
  func.func @transform_2(%arg0: i32, %arg1: i32) -> (i32, i32) {
    %c0_i32 = arith.constant 0 : i32
    %c0_i32_0 = arith.constant 0 : i32
    %c0_i32_1 = arith.constant 0 : i32
    return %c0_i32, %c0_i32_0 : i32, i32
  }
  func.func @transform_3(%arg0: i32, %arg1: i32) -> (i32, i32) {
    %c0_i32 = arith.constant 0 : i32
    %c0_i32_0 = arith.constant 0 : i32
    %c0_i32_1 = arith.constant 0 : i32
    return %c0_i32, %c0_i32_0 : i32, i32
  }
  func.func @transform_4(%arg0: i32, %arg1: i32) -> (i32, i32) {
    %c0_i32 = arith.constant 0 : i32
    %c0_i32_0 = arith.constant 0 : i32
    %c0_i32_1 = arith.constant 0 : i32
    return %c0_i32, %c0_i32_0 : i32, i32
  }
  func.func @transform_5(%arg0: i32, %arg1: i32) -> (i32, i32) {
    %c0_i32 = arith.constant 0 : i32
    %c0_i32_0 = arith.constant 0 : i32
    %c0_i32_1 = arith.constant 0 : i32
    return %c0_i32, %c0_i32_0 : i32, i32
  }
  func.func @transform_6(%arg0: i32, %arg1: i32) -> (i32, i32) {
    %c0_i32 = arith.constant 0 : i32
    %c0_i32_0 = arith.constant 0 : i32
    %c0_i32_1 = arith.constant 0 : i32
    return %c0_i32, %c0_i32_0 : i32, i32
  }
  func.func @transform_7(%arg0: i32, %arg1: i32) -> (i32, i32, i32) {
    %c0_i32 = arith.constant 0 : i32
    %c0_i32_0 = arith.constant 0 : i32
    return %arg0, %arg1, %c0_i32 : i32, i32, i32
  }
  func.func @transform_8(%arg0: i32, %arg1: i32) -> (i32, i32, i32) {
    %c0_i32 = arith.constant 0 : i32
    %c0_i32_0 = arith.constant 0 : i32
    return %arg0, %arg1, %c0_i32 : i32, i32, i32
  }
  func.func @transform_9(%arg0: i32, %arg1: i32) -> (i32, i32, i32) {
    %c0_i32 = arith.constant 0 : i32
    %c0_i32_0 = arith.constant 0 : i32
    return %arg0, %arg1, %c0_i32 : i32, i32, i32
  }
}

</mosaic_0001>

<llo_original>
// kernel: tpu_custom_call.1
$region0: #{tpu_custom_call.1}
  #allocation0 [shape = 'u32[]', space=smem, size = 0x4, offset = 0x4, fixed_abs, tag = 'smem constant byte address 0x4 - core index']
  #allocation1 [shape = 'u32[144,128]{1,0:T(1,128)}', space=vmem, size = 0x12000, scoped, tag = 'internal scratch']
  %s0 = inlined_call_operand.hbm [shape: bf16[2,8,32], index: 0, kind: input, shape index: {}]
  %s1 = inlined_call_operand.hbm [shape: bf16[32,32], index: 1, kind: input, shape index: {}]
  %s2 = inlined_call_operand.vmem [shape: f32[1,32], index: 2, kind: input, shape index: {}]
  %s3 = inlined_call_operand.hbm [shape: bf16[32,32], index: 3, kind: input, shape index: {}]
  %s4 = inlined_call_operand.vmem [shape: f32[1,32], index: 4, kind: input, shape index: {}]
  %s5 = inlined_call_operand.vmem [shape: bf16[32,32], index: 5, kind: input, shape index: {}]
  %s6 = inlined_call_operand.vmem [shape: f32[1,32], index: 6, kind: input, shape index: {}]
  %s7 = inlined_call_operand.hbm [shape: bf16[2,8,32], index: 7, kind: output, shape index: {0}]
  %s8 = inlined_call_operand.hbm [shape: bf16[2,8,32], index: 8, kind: output, shape index: {1}]
  %s9 = inlined_call_operand.hbm [shape: bf16[2,8,32], index: 9, kind: output, shape index: {2}]
  %10 = xla_tuple %s7, %s8, %s9
  %s11 = sld [smem:[#allocation0]]
  $region89: #{tpu_custom_call.1} parent=0
    _
  %s13 = ssub.s32 1, %s11
  %s14 = scalar_select 0, %s13, %s11
  $region1: #{tpu_custom_call.1} parent=0
    #allocation2 [shape = 'u8[4096]{0}', space=vmem, size = 0x1000, scoped, tag = 'input window, operand 0']
    #allocation3 [shape = 's32[2]{0}', space=sflag, size = 0x8, scoped, tag = 'scoped memory for tpu_custom_call.1']
    #allocation4 [shape = 's32[2]{0}', space=sflag, size = 0x8, scoped, tag = 'scoped memory for tpu_custom_call.1']
    #allocation5 [shape = 'u8[8192]{0}', space=vmem, size = 0x2000, scoped, tag = 'input window, operand 1, single buffered']
    #allocation6 [shape = 's32[1]{0}', space=sflag, size = 0x4, scoped, tag = 'scoped memory for tpu_custom_call.1']
    #allocation7 [shape = 'u8[8192]{0}', space=vmem, size = 0x2000, scoped, tag = 'input window, operand 3, single buffered']
    #allocation8 [shape = 'u8[4096]{0}', space=vmem, size = 0x1000, scoped, tag = 'output window, operand 0']
    #allocation9 [shape = 'u8[4096]{0}', space=vmem, size = 0x1000, scoped, tag = 'output window, operand 1']
    #allocation10 [shape = 's32[2]{0}', space=sflag, size = 0x8, scoped, tag = 'scoped memory for tpu_custom_call.1']
    #allocation11 [shape = 'u8[4096]{0}', space=vmem, size = 0x1000, scoped, tag = 'output window, operand 2']
    %15 = vsyncpa [#allocation3], 0
    %s16 = scalar_lea.sflag [#allocation3], 1
    %17 = vsyncpa %s16, 0
    %18 = vsyncpa [#allocation6], 0
    %19 = vsyncpa [#allocation4], 0
    %s20 = scalar_lea.sflag [#allocation4], 1
    %21 = vsyncpa %s20, 0
    %22 = vsyncpa [#allocation10], 0
    %s23 = scalar_lea.sflag [#allocation10], 1
    %24 = vsyncpa %s23, 0
    loop: start=0, step=1, limit=4
    $region2: #{tpu_custom_call.1} parent=1 // loop_pre_header
      _
    $region3: #{tpu_custom_call.1} parent=1 // loop_header
      %s26 = sphi 0, %s30
      %p27 = scmp.ge.s32.totalorder %s26, 4
      %s33 = sphi 0, %s45
      %s34 = sphi 0, %s41
      %s35 = sphi 0, %s33
      %s36 = sphi 0, %s34
      %s37 = sphi 0, %s35
      %s38 = sphi 0, %s36
      %s50 = sphi 0, %s52
      %s53 = sphi 0, %s50
      %s54 = sphi 0, %s53
      %s70 = sphi 0, %s54
      %s74 = sphi 0, %s74
      %s76 = sphi 0, %s74
      %s77 = sphi 0, %s76
      %s91 = sphi 0, %s77
      %s95 = sphi 0, %s95
      %s97 = sphi 0, %s95
      %s98 = sphi 0, %s97
      %s112 = sphi 0, %s98
      %s116 = sphi 0, %s116
      %s118 = sphi 0, %s116
      %s119 = sphi 0, %s118
      %s133 = sphi 0, %s119
      %s137 = sphi 0, %s137
      %s139 = sphi 0, %s137
      %s140 = sphi 0, %s139
      %s154 = sphi 0, %s140
      %s158 = sphi 0, %s158
      %s160 = sphi 0, %s158
      %s161 = sphi 0, %s160
      %s175 = sphi 0, %s161
      %s179 = sphi 0, %s179
      %s181 = sphi 0, %s179
      %s182 = sphi 0, %s181
      %s196 = sphi 0, %s182
      %s204 = sphi 0, %s206
      %s207 = sphi 0, %s204
      %s208 = sphi 0, %s207
      %s224 = sphi 0, %s208
      %s232 = sphi 0, %s234
      %s235 = sphi 0, %s232
      %s236 = sphi 0, %s235
      %s252 = sphi 0, %s236
      %s260 = sphi 0, %s262
      %s263 = sphi 0, %s260
      %s264 = sphi 0, %s263
      %s280 = sphi 0, %s264
    $region4: #{tpu_custom_call.1} parent=1 // loop_header_branch
      %29 = sbr.rel (%p27) target = $region8
    $region5: #{tpu_custom_call.1} parent=1 // loop_body
      %s31 = ssub.s32 %s26, 1
      %s32 = ssub.s32 %s26, 2
      %s39 = sadd.s32 1, %s34
      %p40 = scmp.ge.s32.totalorder %s39, 1
      %s41 = scalar_select %p40, 0, %s39
      %s42 = sadd.s32 1, %s33
      %s43 = scalar_select %p40, %s42, %s33
      %p44 = scmp.ge.s32.totalorder %s43, 2
      %s45 = scalar_select %p44, 0, %s43
      %s46 = ssub.s32 %s33, %s45
      %s47 = ssub.s32 %s34, %s41
      %s48 = sor.u32 %s46, %s47
      %p49 = scmp.eq.s32.totalorder %s48, 0
      %s51 = sadd.s32 %s50, 1
      %s52 = scalar_select %p49, %s50, %s51
      %p55 = pneg %p49
      %p56 = scmp.eq.s32.totalorder %s26, 1
      %p57 = por %p55, %p56
      %p58 = scmp.ne.s32.totalorder %s50, %s53
      %p59 = scmp.eq.s32.totalorder %s26, 0
      %p60 = por %p58, %p59
      %p61 = scmp.ne.s32.totalorder %s50, %s53
      %p62 = scmp.eq.s32.totalorder %s31, 1
      %p63 = por %p61, %p62
      %p64 = scmp.ne.s32.totalorder %s53, %s54
      %p65 = scmp.eq.s32.totalorder %s31, 0
      %p66 = por %p64, %p65
      %p67 = scmp.ne.s32.totalorder %s53, %s54
      %p68 = scmp.eq.s32.totalorder %s32, 1
      %p69 = por %p67, %p68
      %p71 = scmp.ne.s32.totalorder %s54, %s70
      %p72 = scmp.eq.s32.totalorder %s32, 0
      %p73 = por %p71, %p72
      %s75 = sadd.s32 %s74, 1
      %p78 = scmp.eq.s32.totalorder %s26, 1
      %p79 = scmp.ne.s32.totalorder %s74, %s76
      %p80 = scmp.eq.s32.totalorder %s26, 0
      %p81 = por %p79, %p80
      %p82 = scmp.ne.s32.totalorder %s74, %s76
      %p83 = scmp.eq.s32.totalorder %s31, 1
      %p84 = por %p82, %p83
      %p85 = scmp.ne.s32.totalorder %s76, %s77
      %p86 = scmp.eq.s32.totalorder %s31, 0
      %p87 = por %p85, %p86
      %p88 = scmp.ne.s32.totalorder %s76, %s77
      %p89 = scmp.eq.s32.totalorder %s32, 1
      %p90 = por %p88, %p89
      %p92 = scmp.ne.s32.totalorder %s77, %s91
      %p93 = scmp.eq.s32.totalorder %s32, 0
      %p94 = por %p92, %p93
      %s96 = sadd.s32 %s95, 1
      %p99 = scmp.eq.s32.totalorder %s26, 1
      %p100 = scmp.ne.s32.totalorder %s95, %s97
      %p101 = scmp.eq.s32.totalorder %s26, 0
      %p102 = por %p100, %p101
      %p103 = scmp.ne.s32.totalorder %s95, %s97
      %p104 = scmp.eq.s32.totalorder %s31, 1
      %p105 = por %p103, %p104
      %p106 = scmp.ne.s32.totalorder %s97, %s98
      %p107 = scmp.eq.s32.totalorder %s31, 0
      %p108 = por %p106, %p107
      %p109 = scmp.ne.s32.totalorder %s97, %s98
      %p110 = scmp.eq.s32.totalorder %s32, 1
      %p111 = por %p109, %p110
      %p113 = scmp.ne.s32.totalorder %s98, %s112
      %p114 = scmp.eq.s32.totalorder %s32, 0
      %p115 = por %p113, %p114
      %s117 = sadd.s32 %s116, 1
      %p120 = scmp.eq.s32.totalorder %s26, 1
      %p121 = scmp.ne.s32.totalorder %s116, %s118
      %p122 = scmp.eq.s32.totalorder %s26, 0
      %p123 = por %p121, %p122
      %p124 = scmp.ne.s32.totalorder %s116, %s118
      %p125 = scmp.eq.s32.totalorder %s31, 1
      %p126 = por %p124, %p125
      %p127 = scmp.ne.s32.totalorder %s118, %s119
      %p128 = scmp.eq.s32.totalorder %s31, 0
      %p129 = por %p127, %p128
      %p130 = scmp.ne.s32.totalorder %s118, %s119
      %p131 = scmp.eq.s32.totalorder %s32, 1
      %p132 = por %p130, %p131
      %p134 = scmp.ne.s32.totalorder %s119, %s133
      %p135 = scmp.eq.s32.totalorder %s32, 0
      %p136 = por %p134, %p135
      %s138 = sadd.s32 %s137, 1
      %p141 = scmp.eq.s32.totalorder %s26, 1
      %p142 = scmp.ne.s32.totalorder %s137, %s139
      %p143 = scmp.eq.s32.totalorder %s26, 0
      %p144 = por %p142, %p143
      %p145 = scmp.ne.s32.totalorder %s137, %s139
      %p146 = scmp.eq.s32.totalorder %s31, 1
      %p147 = por %p145, %p146
      %p148 = scmp.ne.s32.totalorder %s139, %s140
      %p149 = scmp.eq.s32.totalorder %s31, 0
      %p150 = por %p148, %p149
      %p151 = scmp.ne.s32.totalorder %s139, %s140
      %p152 = scmp.eq.s32.totalorder %s32, 1
      %p153 = por %p151, %p152
      %p155 = scmp.ne.s32.totalorder %s140, %s154
      %p156 = scmp.eq.s32.totalorder %s32, 0
      %p157 = por %p155, %p156
      %s159 = sadd.s32 %s158, 1
      %p162 = scmp.eq.s32.totalorder %s26, 1
      %p163 = scmp.ne.s32.totalorder %s158, %s160
      %p164 = scmp.eq.s32.totalorder %s26, 0
      %p165 = por %p163, %p164
      %p166 = scmp.ne.s32.totalorder %s158, %s160
      %p167 = scmp.eq.s32.totalorder %s31, 1
      %p168 = por %p166, %p167
      %p169 = scmp.ne.s32.totalorder %s160, %s161
      %p170 = scmp.eq.s32.totalorder %s31, 0
      %p171 = por %p169, %p170
      %p172 = scmp.ne.s32.totalorder %s160, %s161
      %p173 = scmp.eq.s32.totalorder %s32, 1
      %p174 = por %p172, %p173
      %p176 = scmp.ne.s32.totalorder %s161, %s175
      %p177 = scmp.eq.s32.totalorder %s32, 0
      %p178 = por %p176, %p177
      %s180 = sadd.s32 %s179, 1
      %p183 = scmp.eq.s32.totalorder %s26, 1
      %p184 = scmp.ne.s32.totalorder %s179, %s181
      %p185 = scmp.eq.s32.totalorder %s26, 0
      %p186 = por %p184, %p185
      %p187 = scmp.ne.s32.totalorder %s179, %s181
      %p188 = scmp.eq.s32.totalorder %s31, 1
      %p189 = por %p187, %p188
      %p190 = scmp.ne.s32.totalorder %s181, %s182
      %p191 = scmp.eq.s32.totalorder %s31, 0
      %p192 = por %p190, %p191
      %p193 = scmp.ne.s32.totalorder %s181, %s182
      %p194 = scmp.eq.s32.totalorder %s32, 1
      %p195 = por %p193, %p194
      %p197 = scmp.ne.s32.totalorder %s182, %s196
      %p198 = scmp.eq.s32.totalorder %s32, 0
      %p199 = por %p197, %p198
      %s200 = ssub.s32 %s33, %s45
      %s201 = ssub.s32 %s34, %s41
      %s202 = sor.u32 %s200, %s201
      %p203 = scmp.eq.s32.totalorder %s202, 0
      %s205 = sadd.s32 %s204, 1
      %s206 = scalar_select %p203, %s204, %s205
      %p209 = pneg %p203
      %p210 = scmp.eq.s32.totalorder %s26, 1
      %p211 = por %p209, %p210
      %p212 = scmp.ne.s32.totalorder %s204, %s207
      %p213 = scmp.eq.s32.totalorder %s26, 0
      %p214 = por %p212, %p213
      %p215 = scmp.ne.s32.totalorder %s204, %s207
      %p216 = scmp.eq.s32.totalorder %s31, 1
      %p217 = por %p215, %p216
      %p218 = scmp.ne.s32.totalorder %s207, %s208
      %p219 = scmp.eq.s32.totalorder %s31, 0
      %p220 = por %p218, %p219
      %p221 = scmp.ne.s32.totalorder %s207, %s208
      %p222 = scmp.eq.s32.totalorder %s32, 1
      %p223 = por %p221, %p222
      %p225 = scmp.ne.s32.totalorder %s208, %s224
      %p226 = scmp.eq.s32.totalorder %s32, 0
      %p227 = por %p225, %p226
      %s228 = ssub.s32 %s33, %s45
      %s229 = ssub.s32 %s34, %s41
      %s230 = sor.u32 %s228, %s229
      %p231 = scmp.eq.s32.totalorder %s230, 0
      %s233 = sadd.s32 %s232, 1
      %s234 = scalar_select %p231, %s232, %s233
      %p237 = pneg %p231
      %p238 = scmp.eq.s32.totalorder %s26, 1
      %p239 = por %p237, %p238
      %p240 = scmp.ne.s32.totalorder %s232, %s235
      %p241 = scmp.eq.s32.totalorder %s26, 0
      %p242 = por %p240, %p241
      %p243 = scmp.ne.s32.totalorder %s232, %s235
      %p244 = scmp.eq.s32.totalorder %s31, 1
      %p245 = por %p243, %p244
      %p246 = scmp.ne.s32.totalorder %s235, %s236
      %p247 = scmp.eq.s32.totalorder %s31, 0
      %p248 = por %p246, %p247
      %p249 = scmp.ne.s32.totalorder %s235, %s236
      %p250 = scmp.eq.s32.totalorder %s32, 1
      %p251 = por %p249, %p250
      %p253 = scmp.ne.s32.totalorder %s236, %s252
      %p254 = scmp.eq.s32.totalorder %s32, 0
      %p255 = por %p253, %p254
      %s256 = ssub.s32 %s33, %s45
      %s257 = ssub.s32 %s34, %s41
      %s258 = sor.u32 %s256, %s257
      %p259 = scmp.eq.s32.totalorder %s258, 0
      %s261 = sadd.s32 %s260, 1
      %s262 = scalar_select %p259, %s260, %s261
      %p265 = pneg %p259
      %p266 = scmp.eq.s32.totalorder %s26, 1
      %p267 = por %p265, %p266
      %p268 = scmp.ne.s32.totalorder %s260, %s263
      %p269 = scmp.eq.s32.totalorder %s26, 0
      %p270 = por %p268, %p269
      %p271 = scmp.ne.s32.totalorder %s260, %s263
      %p272 = scmp.eq.s32.totalorder %s31, 1
      %p273 = por %p271, %p272
      %p274 = scmp.ne.s32.totalorder %s263, %s264
      %p275 = scmp.eq.s32.totalorder %s31, 0
      %p276 = por %p274, %p275
      %p277 = scmp.ne.s32.totalorder %s263, %s264
      %p278 = scmp.eq.s32.totalorder %s32, 1
      %p279 = por %p277, %p278
      %p281 = scmp.ne.s32.totalorder %s264, %s280
      %p282 = scmp.eq.s32.totalorder %s32, 0
      %p283 = por %p281, %p282
      %p284 = scmp.le.s32.totalorder 1, %s26
      %p285 = scmp.lt.s32.totalorder %s26, 3
      %p286 = pnand %p284, %p285
      %p287 = pneg %p286
      // Predicated region
      $region9: #{tpu_custom_call.1} parent=5 // pred_check
        _
      $region10: #{tpu_custom_call.1} parent=5 // pred_check_branch
        %289 = sbr.rel (%p286) target = $region12
      $region11: #{tpu_custom_call.1} parent=5 // pred_region
        %s290 = ssub.s32 %s26, 1
        // Predicated region
        $region13: #{tpu_custom_call.1} parent=11 // pred_check
          %p291 = pneg %p87
        $region14: #{tpu_custom_call.1} parent=11 // pred_check_branch
          %293 = sbr.rel (%p291) target = $region16
        $region15: #{tpu_custom_call.1} parent=11 // pred_region
          %s295 = ssub.s32 256, 256
          %296 = vsyncadd [#allocation6], %s295
          %s297 = sshll.u32 [#allocation5], 4
          %s298 = int_to_ptr.vmem [resolvable:$true] %s297
          %303 = dma.hbm_to_vmem [thread:$0]  %s1, 256, %s298, [#allocation6], 64, 64, 4
        $region16: #{tpu_custom_call.1} parent=11 // pred_fallthru
          _
        // Predicated region
        $region17: #{tpu_custom_call.1} parent=11 // pred_check
          %p304 = pneg %p108
        $region18: #{tpu_custom_call.1} parent=11 // pred_check_branch
          %306 = sbr.rel (%p304) target = $region20
        $region19: #{tpu_custom_call.1} parent=11 // pred_region
          _
        $region20: #{tpu_custom_call.1} parent=11 // pred_fallthru
          _
        // Predicated region
        $region21: #{tpu_custom_call.1} parent=11 // pred_check
          %p307 = pneg %p129
        $region22: #{tpu_custom_call.1} parent=11 // pred_check_branch
          %309 = sbr.rel (%p307) target = $region24
        $region23: #{tpu_custom_call.1} parent=11 // pred_region
          %s311 = ssub.s32 256, 256
          %312 = vsyncadd [#allocation6], %s311
          %s313 = sshll.u32 [#allocation7], 4
          %s314 = int_to_ptr.vmem [resolvable:$true] %s313
          %319 = dma.hbm_to_vmem [thread:$0]  %s3, 256, %s314, [#allocation6], 64, 64, 4
        $region24: #{tpu_custom_call.1} parent=11 // pred_fallthru
          _
        // Predicated region
        $region25: #{tpu_custom_call.1} parent=11 // pred_check
          %p320 = pneg %p150
        $region26: #{tpu_custom_call.1} parent=11 // pred_check_branch
          %322 = sbr.rel (%p320) target = $region28
        $region27: #{tpu_custom_call.1} parent=11 // pred_region
          _
        $region28: #{tpu_custom_call.1} parent=11 // pred_fallthru
          _
        // Predicated region
        $region29: #{tpu_custom_call.1} parent=11 // pred_check
          %p323 = pneg %p171
        $region30: #{tpu_custom_call.1} parent=11 // pred_check_branch
          %325 = sbr.rel (%p323) target = $region32
        $region31: #{tpu_custom_call.1} parent=11 // pred_region
          _
        $region32: #{tpu_custom_call.1} parent=11 // pred_fallthru
          _
        // Predicated region
        $region33: #{tpu_custom_call.1} parent=11 // pred_check
          %p326 = pneg %p192
        $region34: #{tpu_custom_call.1} parent=11 // pred_check_branch
          %328 = sbr.rel (%p326) target = $region36
        $region35: #{tpu_custom_call.1} parent=11 // pred_region
          _
        $region36: #{tpu_custom_call.1} parent=11 // pred_fallthru
          _
      $region12: #{tpu_custom_call.1} parent=5 // pred_fallthru
        _
      %p329 = scmp.lt.s32.totalorder %s26, 2
      // Predicated region
      $region37: #{tpu_custom_call.1} parent=5 // pred_check
        %p330 = pneg %p329
      $region38: #{tpu_custom_call.1} parent=5 // pred_check_branch
        %332 = sbr.rel (%p330) target = $region40
      $region39: #{tpu_custom_call.1} parent=5 // pred_region
        // Predicated region
        $region41: #{tpu_custom_call.1} parent=39 // pred_check
          %p333 = pneg %p60
        $region42: #{tpu_custom_call.1} parent=39 // pred_check_branch
          %335 = sbr.rel (%p333) target = $region44
        $region43: #{tpu_custom_call.1} parent=39 // pred_region
          %s336 = sand.u32 %s50, 1
          %s337 = scalar_lea.sflag [#allocation3], %s336
          %s338 = sand.u32 %s50, 1
          %s339 = smul.addr %s338, 4
          %s340 = scalar_lea.vmem [#allocation2], %s339
          %s342 = ssub.s32 64, 64
          %343 = vsyncadd %s337, %s342
          %s344 = sadd.s32 %s34, %s33
          %s345 = smul.addr %s344, 64
          %s346 = scalar_lea.hbm %s0, %s345
          %s348 = sshll.u32 %s340, 4
          %s349 = int_to_ptr.vmem [resolvable:$true] %s348
          %351 = dma.hbm_to_vmem [thread:$0]  %s346, 64, %s349, %s337
        $region44: #{tpu_custom_call.1} parent=39 // pred_fallthru
          _
      $region40: #{tpu_custom_call.1} parent=5 // pred_fallthru
        _
      %p352 = scmp.le.s32.totalorder 1, %s26
      %p353 = scmp.lt.s32.totalorder %s26, 3
      %p354 = pnand %p352, %p353
      %p355 = pneg %p354
      // Predicated region
      $region45: #{tpu_custom_call.1} parent=5 // pred_check
        _
      $region46: #{tpu_custom_call.1} parent=5 // pred_check_branch
        %357 = sbr.rel (%p354) target = $region48
      $region47: #{tpu_custom_call.1} parent=5 // pred_region
        %s358 = ssub.s32 %s26, 1
        %s359 = sand.u32 %s53, 1
        %s360 = scalar_lea.sflag [#allocation3], %s359
        %s361 = sand.u32 %s53, 1
        %s362 = smul.addr %s361, 4
        %s363 = scalar_lea.vmem [#allocation2], %s362
        // Predicated region
        $region49: #{tpu_custom_call.1} parent=47 // pred_check
          %p364 = pneg %p66
        $region50: #{tpu_custom_call.1} parent=47 // pred_check_branch
          %366 = sbr.rel (%p364) target = $region52
        $region51: #{tpu_custom_call.1} parent=47 // pred_region
          %367 = dma.done %s360, 64
        $region52: #{tpu_custom_call.1} parent=47 // pred_fallthru
          _
        // Predicated region
        $region53: #{tpu_custom_call.1} parent=47 // pred_check
          %p368 = pneg %p87
        $region54: #{tpu_custom_call.1} parent=47 // pred_check_branch
          %370 = sbr.rel (%p368) target = $region56
        $region55: #{tpu_custom_call.1} parent=47 // pred_region
          %371 = dma.done [#allocation6], 256
        $region56: #{tpu_custom_call.1} parent=47 // pred_fallthru
          _
        // Predicated region
        $region57: #{tpu_custom_call.1} parent=47 // pred_check
          %p372 = pneg %p129
        $region58: #{tpu_custom_call.1} parent=47 // pred_check_branch
          %374 = sbr.rel (%p372) target = $region60
        $region59: #{tpu_custom_call.1} parent=47 // pred_region
          %375 = dma.done [#allocation6], 256
        $region60: #{tpu_custom_call.1} parent=47 // pred_fallthru
          _
        %s376 = sand.u32 %s53, 1
        %s377 = scalar_lea.sflag [#allocation3], %s376
        %s378 = sand.u32 %s53, 1
        %s379 = smul.addr %s378, 4
        %s380 = scalar_lea.vmem [#allocation2], %s379
        %p381 = pneg %p66
        %p382 = pneg %p63
        %p383 = pneg %p87
        %p384 = pneg %p84
        %p385 = pneg %p108
        %p386 = pneg %p105
        %p387 = pneg %p129
        %p388 = pneg %p126
        %p389 = pneg %p150
        %p390 = pneg %p147
        %p391 = pneg %p171
        %p392 = pneg %p168
        %p393 = pneg %p192
        %p394 = pneg %p189
        %p395 = pneg %p220
        %p396 = pneg %p217
        %s397 = sand.u32 %s207, 1
        %s398 = scalar_lea.sflag [#allocation4], %s397
        %s399 = sand.u32 %s207, 1
        %s400 = smul.addr %s399, 4
        %s401 = scalar_lea.vmem [#allocation8], %s400
        %p402 = pneg %p248
        %p403 = pneg %p245
        %s404 = sand.u32 %s31, 1
        %s405 = scalar_lea.sflag [#allocation10], %s404
        %s406 = sand.u32 %s235, 1
        %s407 = smul.addr %s406, 4
        %s408 = scalar_lea.vmem [#allocation9], %s407
        %p409 = pneg %p276
        %p410 = pneg %p273
        %s411 = sand.u32 %s31, 1
        %s412 = scalar_lea.sflag [#allocation10], %s411
        %s413 = sand.u32 %s263, 1
        %s414 = smul.addr %s413, 4
        %s415 = scalar_lea.vmem [#allocation11], %s414
        %v417 = vld [vmem:[%s363] sm:$0xf]
        %v418 = vld [vmem:[#allocation5] sm:$0xf]
        %v419 = vld [vmem:[#allocation5 + $0x4] sm:$0xf]
        %v420 = vld [vmem:[#allocation5 + $0x8] sm:$0xf]
        %v421 = vld [vmem:[#allocation5 + $0xc] sm:$0xf]
        %v422 = vld [vmem:[%s2] sm:$0x1]
        %v424 = vlaneseq
        %v425 = vshrl.u32 %v424, 7
        %v426 = vsub.s32 0, %v425
        %v427 = vrot.slane %v422, %v426
        %v433 = vunpack.c.l.b16 %v418
        %v434 = vunpack.c.l.b16 %v419
        %v435 = vunpack.c.l.b16 %v420
        %v436 = vunpack.c.l.b16 %v421
        %v437 = vpack.c.b16 %v434, %v433
        %v438 = vpack.c.b16 %v436, %v435
        %vm441 = vcmask 261120
        %v443 = vsel %vm441, %v417, 0
        %445 = vmatprep.subr.bf16.mxu0 0
        %446 = vmatpush1.bf16.msra.mxu0 %v437
        %447 = vmatprep.subr.bf16.mxu0 0
        %448 = vmatpush1.bf16.msra.mxu0 %v438
        %449 = vmatprep.subr.bf16.mxu0 0
        %450 = vmatpush1.bf16.msra.mxu0 0
        %451 = vmatprep.subr.bf16.mxu0 0
        %452 = vmatpush1.bf16.msra.mxu0 0
        %453 = vmatprep.subr.bf16.mxu0 0
        %454 = vmatpush1.bf16.msra.mxu0 0
        %455 = vmatprep.subr.bf16.mxu0 0
        %456 = vmatpush1.bf16.msra.mxu0 0
        %457 = vmatprep.subr.bf16.mxu0 0
        %458 = vmatpush1.bf16.msra.mxu0 0
        %459 = vmatprep.subr.bf16.mxu0 0
        %460 = vmatpush1.bf16.msra.mxu0 0
        %461 = vmatprep.subr.bf16.mxu0 0
        %462 = vmatpush1.bf16.msra.mxu0 0
        %463 = vmatprep.subr.bf16.mxu0 0
        %464 = vmatpush1.bf16.msra.mxu0 0
        %465 = vmatprep.subr.bf16.mxu0 0
        %466 = vmatpush1.bf16.msra.mxu0 0
        %467 = vmatprep.subr.bf16.mxu0 0
        %468 = vmatpush1.bf16.msra.mxu0 0
        %469 = vmatprep.subr.bf16.mxu0 0
        %470 = vmatpush1.bf16.msra.mxu0 0
        %471 = vmatprep.subr.bf16.mxu0 0
        %472 = vmatpush1.bf16.msra.mxu0 0
        %473 = vmatprep.subr.bf16.mxu0 0
        %474 = vmatpush1.bf16.msra.mxu0 0
        %475 = vmatprep.subr.bf16.mxu0 0
        %476 = vmatpush1.bf16.msra.mxu0 0
        %477 = vmatprep.mubr.bf16.mxu0 0
        %478 = vmatmul.mubr.bf16.gmra.mrb[0].mxu0 %v443
        %v479 = vpop.f32.mrb[0].mxu0
        %v480 = vadd.f32 %v427, %v479
        %v481 = vpop.f32.mrb[0].mxu0
        %v482 = vpop.f32.mrb[0].mxu0
        %v483 = vpop.f32.mrb[0].mxu0
        %484 = vdwg.mxu0
        %v485 = vld [vmem:[#allocation7] sm:$0xf]
        %v486 = vld [vmem:[#allocation7 + $0x4] sm:$0xf]
        %v487 = vld [vmem:[#allocation7 + $0x8] sm:$0xf]
        %v488 = vld [vmem:[#allocation7 + $0xc] sm:$0xf]
        %v489 = vld [vmem:[%s4] sm:$0x1]
        %v491 = vlaneseq
        %v492 = vshrl.u32 %v491, 7
        %v493 = vsub.s32 0, %v492
        %v494 = vrot.slane %v489, %v493
        %v500 = vunpack.c.l.b16 %v485
        %v501 = vunpack.c.l.b16 %v486
        %v502 = vunpack.c.l.b16 %v487
        %v503 = vunpack.c.l.b16 %v488
        %v504 = vpack.c.b16 %v501, %v500
        %v505 = vpack.c.b16 %v503, %v502
        %508 = vmatprep.subr.bf16.mxu0 0
        %509 = vmatpush1.bf16.msra.mxu0 %v504
        %510 = vmatprep.subr.bf16.mxu0 0
        %511 = vmatpush1.bf16.msra.mxu0 %v505
        %512 = vmatprep.subr.bf16.mxu0 0
        %513 = vmatpush1.bf16.msra.mxu0 0
        %514 = vmatprep.subr.bf16.mxu0 0
        %515 = vmatpush1.bf16.msra.mxu0 0
        %516 = vmatprep.subr.bf16.mxu0 0
        %517 = vmatpush1.bf16.msra.mxu0 0
        %518 = vmatprep.subr.bf16.mxu0 0
        %519 = vmatpush1.bf16.msra.mxu0 0
        %520 = vmatprep.subr.bf16.mxu0 0
        %521 = vmatpush1.bf16.msra.mxu0 0
        %522 = vmatprep.subr.bf16.mxu0 0
        %523 = vmatpush1.bf16.msra.mxu0 0
        %524 = vmatprep.subr.bf16.mxu0 0
        %525 = vmatpush1.bf16.msra.mxu0 0
        %526 = vmatprep.subr.bf16.mxu0 0
        %527 = vmatpush1.bf16.msra.mxu0 0
        %528 = vmatprep.subr.bf16.mxu0 0
        %529 = vmatpush1.bf16.msra.mxu0 0
        %530 = vmatprep.subr.bf16.mxu0 0
        %531 = vmatpush1.bf16.msra.mxu0 0
        %532 = vmatprep.subr.bf16.mxu0 0
        %533 = vmatpush1.bf16.msra.mxu0 0
        %534 = vmatprep.subr.bf16.mxu0 0
        %535 = vmatpush1.bf16.msra.mxu0 0
        %536 = vmatprep.subr.bf16.mxu0 0
        %537 = vmatpush1.bf16.msra.mxu0 0
        %538 = vmatprep.subr.bf16.mxu0 0
        %539 = vmatpush1.bf16.msra.mxu0 0
        %540 = vmatprep.mubr.bf16.mxu0 0
        %541 = vmatmul.mubr.bf16.gmra.mrb[0].mxu0 %v443
        %v542 = vpop.f32.mrb[0].mxu0
        %v543 = vadd.f32 %v494, %v542
        %v544 = vpop.f32.mrb[0].mxu0
        %v545 = vpop.f32.mrb[0].mxu0
        %v546 = vpop.f32.mrb[0].mxu0
        %547 = vdwg.mxu0
        %v548 = vld [vmem:[%s5] sm:$0xf]
        %v549 = vld [vmem:[%s5 + $0x4] sm:$0xf]
        %v550 = vld [vmem:[%s5 + $0x8] sm:$0xf]
        %v551 = vld [vmem:[%s5 + $0xc] sm:$0xf]
        %v552 = vld [vmem:[%s6] sm:$0x1]
        %v554 = vlaneseq
        %v555 = vshrl.u32 %v554, 7
        %v556 = vsub.s32 0, %v555
        %v557 = vrot.slane %v552, %v556
        %v563 = vunpack.c.l.b16 %v548
        %v564 = vunpack.c.l.b16 %v549
        %v565 = vunpack.c.l.b16 %v550
        %v566 = vunpack.c.l.b16 %v551
        %v567 = vpack.c.b16 %v564, %v563
        %v568 = vpack.c.b16 %v566, %v565
        %571 = vmatprep.subr.bf16.mxu0 0
        %572 = vmatpush1.bf16.msra.mxu0 %v567
        %573 = vmatprep.subr.bf16.mxu0 0
        %574 = vmatpush1.bf16.msra.mxu0 %v568
        %575 = vmatprep.subr.bf16.mxu0 0
        %576 = vmatpush1.bf16.msra.mxu0 0
        %577 = vmatprep.subr.bf16.mxu0 0
        %578 = vmatpush1.bf16.msra.mxu0 0
        %579 = vmatprep.subr.bf16.mxu0 0
        %580 = vmatpush1.bf16.msra.mxu0 0
        %581 = vmatprep.subr.bf16.mxu0 0
        %582 = vmatpush1.bf16.msra.mxu0 0
        %583 = vmatprep.subr.bf16.mxu0 0
        %584 = vmatpush1.bf16.msra.mxu0 0
        %585 = vmatprep.subr.bf16.mxu0 0
        %586 = vmatpush1.bf16.msra.mxu0 0
        %587 = vmatprep.subr.bf16.mxu0 0
        %588 = vmatpush1.bf16.msra.mxu0 0
        %589 = vmatprep.subr.bf16.mxu0 0
        %590 = vmatpush1.bf16.msra.mxu0 0
        %591 = vmatprep.subr.bf16.mxu0 0
        %592 = vmatpush1.bf16.msra.mxu0 0
        %593 = vmatprep.subr.bf16.mxu0 0
        %594 = vmatpush1.bf16.msra.mxu0 0
        %595 = vmatprep.subr.bf16.mxu0 0
        %596 = vmatpush1.bf16.msra.mxu0 0
        %597 = vmatprep.subr.bf16.mxu0 0
        %598 = vmatpush1.bf16.msra.mxu0 0
        %599 = vmatprep.subr.bf16.mxu0 0
        %600 = vmatpush1.bf16.msra.mxu0 0
        %601 = vmatprep.subr.bf16.mxu0 0
        %602 = vmatpush1.bf16.msra.mxu0 0
        %603 = vmatprep.mubr.bf16.mxu0 0
        %604 = vmatmul.mubr.bf16.gmra.mrb[0].mxu0 %v443
        %v605 = vpop.f32.mrb[0].mxu0
        %v606 = vadd.f32 %v557, %v605
        %v607 = vpop.f32.mrb[0].mxu0
        %v608 = vpop.f32.mrb[0].mxu0
        %v609 = vpop.f32.mrb[0].mxu0
        %610 = vdwg.mxu0
        %v611 = vpack.c.bf16 %v480, %v480
        %vm612 = vcmask 257024
        %613 = vst.msk [vmem:[%s401] sm:$0xf] %vm612, %v611
        %v614 = vpack.c.bf16 %v543, %v543
        %615 = vst.msk [vmem:[%s408] sm:$0xf] %vm612, %v614
        %v616 = vpack.c.bf16 %v606, %v606
        %617 = vst.msk [vmem:[%s415] sm:$0xf] %vm612, %v616
        %s618 = sand.u32 %s207, 1
        %s619 = scalar_lea.sflag [#allocation4], %s618
        %s620 = sand.u32 %s207, 1
        %s621 = smul.addr %s620, 4
        %s622 = scalar_lea.vmem [#allocation8], %s621
        %s623 = sand.u32 %s31, 1
        %s624 = scalar_lea.sflag [#allocation10], %s623
        %s625 = sand.u32 %s235, 1
        %s626 = smul.addr %s625, 4
        %s627 = scalar_lea.vmem [#allocation9], %s626
        %s628 = sand.u32 %s31, 1
        %s629 = scalar_lea.sflag [#allocation10], %s628
        %s630 = sand.u32 %s263, 1
        %s631 = smul.addr %s630, 4
        %s632 = scalar_lea.vmem [#allocation11], %s631
        // Predicated region
        $region61: #{tpu_custom_call.1} parent=47 // pred_check
          %p633 = pneg %p217
        $region62: #{tpu_custom_call.1} parent=47 // pred_check_branch
          %635 = sbr.rel (%p633) target = $region64
        $region63: #{tpu_custom_call.1} parent=47 // pred_region
          %s637 = ssub.s32 64, 64
          %638 = vsyncadd %s619, %s637
          %s639 = sadd.s32 %s36, %s35
          %s640 = smul.addr %s639, 64
          %s641 = scalar_lea.hbm %s7, %s640
          %s643 = sshll.u32 %s622, 4
          %s644 = int_to_ptr.vmem [resolvable:$true] %s643
          %646 = dma.vmem_to_hbm [thread:$0]  %s644, 64, %s641, %s619
        $region64: #{tpu_custom_call.1} parent=47 // pred_fallthru
          _
        // Predicated region
        $region65: #{tpu_custom_call.1} parent=47 // pred_check
          %p647 = pneg %p245
        $region66: #{tpu_custom_call.1} parent=47 // pred_check_branch
          %649 = sbr.rel (%p647) target = $region68
        $region67: #{tpu_custom_call.1} parent=47 // pred_region
          %s651 = ssub.s32 64, 64
          %652 = vsyncadd %s624, %s651
          %s653 = sadd.s32 %s36, %s35
          %s654 = smul.addr %s653, 64
          %s655 = scalar_lea.hbm %s8, %s654
          %s657 = sshll.u32 %s627, 4
          %s658 = int_to_ptr.vmem [resolvable:$true] %s657
          %660 = dma.vmem_to_hbm [thread:$0]  %s658, 64, %s655, %s624
        $region68: #{tpu_custom_call.1} parent=47 // pred_fallthru
          _
        // Predicated region
        $region69: #{tpu_custom_call.1} parent=47 // pred_check
          %p661 = pneg %p273
        $region70: #{tpu_custom_call.1} parent=47 // pred_check_branch
          %663 = sbr.rel (%p661) target = $region72
        $region71: #{tpu_custom_call.1} parent=47 // pred_region
          %s665 = ssub.s32 64, 64
          %666 = vsyncadd %s629, %s665
          %s667 = sadd.s32 %s36, %s35
          %s668 = smul.addr %s667, 64
          %s669 = scalar_lea.hbm %s9, %s668
          %s671 = sshll.u32 %s632, 4
          %s672 = int_to_ptr.vmem [resolvable:$true] %s671
          %674 = dma.vmem_to_hbm [thread:$0]  %s672, 64, %s669, %s629
        $region72: #{tpu_custom_call.1} parent=47 // pred_fallthru
          _
      $region48: #{tpu_custom_call.1} parent=5 // pred_fallthru
        _
      %p675 = scmp.le.s32.totalorder 2, %s26
      // Predicated region
      $region73: #{tpu_custom_call.1} parent=5 // pred_check
        %p676 = pneg %p675
      $region74: #{tpu_custom_call.1} parent=5 // pred_check_branch
        %678 = sbr.rel (%p676) target = $region76
      $region75: #{tpu_custom_call.1} parent=5 // pred_region
        %s679 = ssub.s32 %s26, 2
        // Predicated region
        $region77: #{tpu_custom_call.1} parent=75 // pred_check
          %p680 = pneg %p223
        $region78: #{tpu_custom_call.1} parent=75 // pred_check_branch
          %682 = sbr.rel (%p680) target = $region80
        $region79: #{tpu_custom_call.1} parent=75 // pred_region
          %s683 = sand.u32 %s208, 1
          %s684 = scalar_lea.sflag [#allocation4], %s683
          %s685 = sand.u32 %s208, 1
          %s686 = smul.addr %s685, 4
          %s687 = scalar_lea.vmem [#allocation8], %s686
          %688 = dma.done %s684, 64
        $region80: #{tpu_custom_call.1} parent=75 // pred_fallthru
          _
        // Predicated region
        $region81: #{tpu_custom_call.1} parent=75 // pred_check
          %p689 = pneg %p251
        $region82: #{tpu_custom_call.1} parent=75 // pred_check_branch
          %691 = sbr.rel (%p689) target = $region84
        $region83: #{tpu_custom_call.1} parent=75 // pred_region
          %s692 = sand.u32 %s32, 1
          %s693 = scalar_lea.sflag [#allocation10], %s692
          %s694 = sand.u32 %s236, 1
          %s695 = smul.addr %s694, 4
          %s696 = scalar_lea.vmem [#allocation9], %s695
          %697 = dma.done %s693, 64
        $region84: #{tpu_custom_call.1} parent=75 // pred_fallthru
          _
        // Predicated region
        $region85: #{tpu_custom_call.1} parent=75 // pred_check
          %p698 = pneg %p279
        $region86: #{tpu_custom_call.1} parent=75 // pred_check_branch
          %700 = sbr.rel (%p698) target = $region88
        $region87: #{tpu_custom_call.1} parent=75 // pred_region
          %s701 = sand.u32 %s32, 1
          %s702 = scalar_lea.sflag [#allocation10], %s701
          %s703 = sand.u32 %s264, 1
          %s704 = smul.addr %s703, 4
          %s705 = scalar_lea.vmem [#allocation11], %s704
          %706 = dma.done %s702, 64
        $region88: #{tpu_custom_call.1} parent=75 // pred_fallthru
          _
      $region76: #{tpu_custom_call.1} parent=5 // pred_fallthru
        _
    $region6: #{tpu_custom_call.1} parent=1 // loop_footer
      %s30 = sadd.s32 1, %s26
    $region7: #{tpu_custom_call.1} parent=1 // loop_footer_branch
      %25 = sbr.rel target = $region3
    $region8: #{tpu_custom_call.1} parent=1 // loop_exit
      _
    %707 = vsyncpa [#allocation3], 1
    %s708 = scalar_lea.sflag [#allocation3], 1
    %709 = vsyncpa %s708, 1
    %710 = vsyncpa [#allocation6], 1
    %711 = vsyncpa [#allocation4], 1
    %s712 = scalar_lea.sflag [#allocation4], 1
    %713 = vsyncpa %s712, 1
    %714 = vsyncpa [#allocation10], 1
    %s715 = scalar_lea.sflag [#allocation10], 1
    %716 = vsyncpa %s715, 1

</llo_original>
